<compile_context>
chip_gen: v7x
topology: tpu7x:2x2x1
jax: 0.10.0
libtpu: 0.0.40
codegen_flags: <defaults>
</compile_context>

<pallas_src>
import jax
import jax.numpy as jnp
from jax.experimental import pallas as pl
from jax.experimental.pallas import tpu as pltpu

LANE = 128  # TPU vreg lane width


def _round_up(n, m):
    return ((n + m - 1) // m) * m


def _make_combiner_kernel(feat_sizes):
    """Build the kernel closed over the (static) per-input feature widths."""
    num_inputs = len(feat_sizes)

    def kernel(*refs):
        x_refs = refs[:num_inputs]
        w1_ref, b1_ref, w2_ref, b2_ref, o_ref = refs[num_inputs:]

        # fc1 with the concat fused in VMEM:
        #   h = sum_i x_i @ W1[off_i : off_i + F_i, :]    (f32 accumulation)
        h = None
        off = 0
        for x_ref, f in zip(x_refs, feat_sizes):
            part = jnp.dot(x_ref[...], w1_ref[off:off + f, :],
                           preferred_element_type=jnp.float32)
            h = part if h is None else h + part
            off += f

        # bias + ReLU in f32 (safe on v5e, which has no bf16 VPU/EUP).
        h = jnp.maximum(h + b1_ref[...].astype(jnp.float32), 0.0)

        # fc2: (TILE_B, hidden_p) @ (hidden_p, out_p) + bias
        y = jnp.dot(h.astype(w2_ref.dtype), w2_ref[...],
                    preferred_element_type=jnp.float32)
        y = y + b2_ref[...].astype(jnp.float32)
        o_ref[...] = y.astype(o_ref.dtype)

    return kernel


def combiner_forward(inputs, w1, b1, w2, b2, *, tile_b=512):
    """y = ReLU(concat(inputs, -1) @ w1 + b1) @ w2 + b2.

    inputs : list of (B, F_i) arrays (the *inputs of Combiner.forward)
    w1     : (sum(F_i), hidden)   -- transpose of PyTorch fc1.weight
    b1     : (hidden,)
    w2     : (hidden, out)        -- transpose of PyTorch fc2.weight
    b2     : (out,)
    """
    feat_sizes = tuple(int(x.shape[1]) for x in inputs)
    total_in = sum(feat_sizes)
    B = int(inputs[0].shape[0])
    hidden = int(w1.shape[1])
    out_f = int(w2.shape[1])
    dtype = inputs[0].dtype
    bytes_per = jnp.dtype(dtype).itemsize

    # ---- lane-dense padding of hidden / output widths (zero columns/rows) ----
    hidden_p = _round_up(hidden, LANE)
    out_p = _round_up(out_f, LANE)
    w1_p = jnp.pad(w1, ((0, 0), (0, hidden_p - hidden)))
    b1_p = jnp.pad(b1, (0, hidden_p - hidden)).reshape(1, hidden_p)
    w2_p = jnp.pad(w2, ((0, hidden_p - hidden), (0, out_p - out_f)))
    b2_p = jnp.pad(b2, (0, out_p - out_f)).reshape(1, out_p)

    # ---- batch tiling: tile_b is a multiple of 8 and divides the padded B ----
    tile_b = min(tile_b, _round_up(B, 8))
    B_pad = _round_up(B, tile_b)
    if B_pad != B:
        inputs = [jnp.pad(x, ((0, B_pad - B), (0, 0))) for x in inputs]
    grid = (B_pad // tile_b,)

    # ---- BlockSpecs: activations tiled over batch, weights resident ----
    in_specs = [pl.BlockSpec((tile_b, f), lambda i: (i, 0)) for f in feat_sizes]
    in_specs += [
        pl.BlockSpec((total_in, hidden_p), lambda i: (0, 0)),  # w1 (resident)
        pl.BlockSpec((1, hidden_p), lambda i: (0, 0)),         # b1 (resident)
        pl.BlockSpec((hidden_p, out_p), lambda i: (0, 0)),     # w2 (resident)
        pl.BlockSpec((1, out_p), lambda i: (0, 0)),            # b2 (resident)
    ]
    out_spec = pl.BlockSpec((tile_b, out_p), lambda i: (i, 0))

    # ---- explicit VMEM budget (v7x-safe: 64 MiB physical / 32 MiB scoped) ----
    weight_bytes = (total_in * hidden_p + hidden_p * out_p
                    + hidden_p + out_p) * bytes_per
    stream_bytes = 2 * tile_b * (total_in + out_p) * bytes_per  # 2x double-buffered
    scratch_bytes = tile_b * (hidden_p + out_p) * 4             # f32 intermediates
    vmem_limit = min(max(2 * (weight_bytes + stream_bytes + scratch_bytes),
                         4 * 1024 * 1024),
                     48 * 1024 * 1024)

    cost = pl.CostEstimate(
        flops=2 * B_pad * total_in * hidden_p + 2 * B_pad * hidden_p * out_p,
        transcendentals=0,
        bytes_accessed=(B_pad * (total_in + out_p)
                        + total_in * hidden_p + hidden_p * out_p
                        + hidden_p + out_p) * bytes_per,
    )

    out_padded = pl.pallas_call(
        _make_combiner_kernel(feat_sizes),
        out_shape=jax.ShapeDtypeStruct((B_pad, out_p), dtype),
        grid_spec=pltpu.PrefetchScalarGridSpec(
            num_scalar_prefetch=0,
            grid=grid,
            in_specs=in_specs,
            out_specs=out_spec,
        ),
        compiler_params=pltpu.CompilerParams(
            dimension_semantics=("parallel",),   # batch tiles -> both v7x TCs
            vmem_limit_bytes=vmem_limit,
        ),
        cost_estimate=cost,
    )(*inputs, w1_p, b1_p, w2_p, b2_p)

    # Strip batch / lane padding back off.
    return out_padded[:B, :out_f]


if __name__ == "__main__":
    # Small shapes consistent with the module's forward:
    #   num_inputs=4 tensors of (batch, input_features)
    batch = 8
    input_features = 32
    num_inputs = 4
    hidden_dim = 32
    output_features = 32
    total_in = input_features * num_inputs  # 128

    key = jax.random.PRNGKey(0)
    k_in, k_w1, k_b1, k_w2, k_b2 = jax.random.split(key, 5)

    # Deterministic parameter init (mimics nn.Linear's U(-1/sqrt(fan_in), ...)).
    bound1 = 1.0 / jnp.sqrt(jnp.float32(total_in))
    bound2 = 1.0 / jnp.sqrt(jnp.float32(hidden_dim))
    w1 = jax.random.uniform(k_w1, (total_in, hidden_dim), jnp.float32,
                            minval=-bound1, maxval=bound1)
    b1 = jax.random.uniform(k_b1, (hidden_dim,), jnp.float32,
                            minval=-bound1, maxval=bound1)
    w2 = jax.random.uniform(k_w2, (hidden_dim, output_features), jnp.float32,
                            minval=-bound2, maxval=bound2)
    b2 = jax.random.uniform(k_b2, (output_features,), jnp.float32,
                            minval=-bound2, maxval=bound2)

    # Four input tensors (as in forward(*inputs)).
    in_keys = jax.random.split(k_in, num_inputs)
    inputs = [jax.random.normal(k, (batch, input_features), jnp.float32)
              for k in in_keys]

    out = combiner_forward(inputs, w1, b1, w2, b2)
    out = jax.block_until_ready(out)

    # Pure-JAX reference check.
    x_ref = jnp.concatenate(inputs, axis=-1)
    ref = jnp.maximum(x_ref @ w1 + b1, 0.0) @ w2 + b2
    assert out.shape == (batch, output_features)
    assert jnp.allclose(out, ref, atol=1e-5, rtol=1e-5), "mismatch vs reference"

    print("KERNEL_OK")
</pallas_src>

<mosaic_0001>
module attributes {stable_mosaic.version = 11 : i64} {
  func.func @kernel(%arg0: i32, %arg1: memref<8x32xf32, #tpu.memory_space<vmem>>, %arg2: memref<8x32xf32, #tpu.memory_space<vmem>>, %arg3: memref<8x32xf32, #tpu.memory_space<vmem>>, %arg4: memref<8x32xf32, #tpu.memory_space<vmem>>, %arg5: memref<128x128xf32, #tpu.memory_space<vmem>>, %arg6: memref<1x128xf32, #tpu.memory_space<vmem>>, %arg7: memref<128x128xf32, #tpu.memory_space<vmem>>, %arg8: memref<1x128xf32, #tpu.memory_space<vmem>>, %arg9: memref<8x128xf32, #tpu.memory_space<vmem>>) attributes {dimension_semantics = [#tpu.dimension_semantics<parallel>], iteration_bounds = array<i64: 1>, scalar_prefetch = 0 : i64, scratch_operands = 0 : i64, tpu.core_type = #tpu.core_type<tc>, window_params = [{transform_indices = @transform_0, window_bounds = array<i64: 8, 32>}, {transform_indices = @transform_1, window_bounds = array<i64: 8, 32>}, {transform_indices = @transform_2, window_bounds = array<i64: 8, 32>}, {transform_indices = @transform_3, window_bounds = array<i64: 8, 32>}, {pipeline_mode = #tpu.pipeline_mode<synchronous>, transform_indices = @transform_4, window_bounds = array<i64: 128, 128>}, {pipeline_mode = #tpu.pipeline_mode<synchronous>, transform_indices = @transform_5, window_bounds = array<i64: 1, 128>}, {pipeline_mode = #tpu.pipeline_mode<synchronous>, transform_indices = @transform_6, window_bounds = array<i64: 128, 128>}, {pipeline_mode = #tpu.pipeline_mode<synchronous>, transform_indices = @transform_7, window_bounds = array<i64: 1, 128>}, {transform_indices = @transform_8, window_bounds = array<i64: 8, 128>}]} {
    %c0 = arith.constant 0 : index
    %c0_0 = arith.constant 0 : index
    %0 = vector.load %arg1[%c0, %c0_0] : memref<8x32xf32, #tpu.memory_space<vmem>>, vector<8x32xf32>
    %c0_1 = arith.constant 0 : index
    %c0_2 = arith.constant 0 : index
    %1 = vector.load %arg5[%c0_1, %c0_2] : memref<128x128xf32, #tpu.memory_space<vmem>>, vector<32x128xf32>
    %cst = arith.constant dense<0.000000e+00> : vector<8x128xf32>
    %2 = tpu.matmul %0, %1, %cst {dimension_numbers = #tpu.dot_dimension_numbers<[1], [0], [0], [1], [0, 0, 1, 1], [], []>} : vector<8x32xf32>, vector<32x128xf32>, vector<8x128xf32> -> vector<8x128xf32>
    %c0_3 = arith.constant 0 : index
    %c0_4 = arith.constant 0 : index
    %3 = vector.load %arg2[%c0_3, %c0_4] : memref<8x32xf32, #tpu.memory_space<vmem>>, vector<8x32xf32>
    %c32 = arith.constant 32 : index
    %c0_5 = arith.constant 0 : index
    %4 = vector.load %arg5[%c32, %c0_5] : memref<128x128xf32, #tpu.memory_space<vmem>>, vector<32x128xf32>
    %cst_6 = arith.constant dense<0.000000e+00> : vector<8x128xf32>
    %5 = tpu.matmul %3, %4, %cst_6 {dimension_numbers = #tpu.dot_dimension_numbers<[1], [0], [0], [1], [0, 0, 1, 1], [], []>} : vector<8x32xf32>, vector<32x128xf32>, vector<8x128xf32> -> vector<8x128xf32>
    %6 = arith.addf %2, %5 : vector<8x128xf32>
    %c0_7 = arith.constant 0 : index
    %c0_8 = arith.constant 0 : index
    %7 = vector.load %arg3[%c0_7, %c0_8] : memref<8x32xf32, #tpu.memory_space<vmem>>, vector<8x32xf32>
    %c64 = arith.constant 64 : index
    %c0_9 = arith.constant 0 : index
    %8 = vector.load %arg5[%c64, %c0_9] : memref<128x128xf32, #tpu.memory_space<vmem>>, vector<32x128xf32>
    %cst_10 = arith.constant dense<0.000000e+00> : vector<8x128xf32>
    %9 = tpu.matmul %7, %8, %cst_10 {dimension_numbers = #tpu.dot_dimension_numbers<[1], [0], [0], [1], [0, 0, 1, 1], [], []>} : vector<8x32xf32>, vector<32x128xf32>, vector<8x128xf32> -> vector<8x128xf32>
    %10 = arith.addf %6, %9 : vector<8x128xf32>
    %c0_11 = arith.constant 0 : index
    %c0_12 = arith.constant 0 : index
    %11 = vector.load %arg4[%c0_11, %c0_12] : memref<8x32xf32, #tpu.memory_space<vmem>>, vector<8x32xf32>
    %c96 = arith.constant 96 : index
    %c0_13 = arith.constant 0 : index
    %12 = vector.load %arg5[%c96, %c0_13] : memref<128x128xf32, #tpu.memory_space<vmem>>, vector<32x128xf32>
    %cst_14 = arith.constant dense<0.000000e+00> : vector<8x128xf32>
    %13 = tpu.matmul %11, %12, %cst_14 {dimension_numbers = #tpu.dot_dimension_numbers<[1], [0], [0], [1], [0, 0, 1, 1], [], []>} : vector<8x32xf32>, vector<32x128xf32>, vector<8x128xf32> -> vector<8x128xf32>
    %14 = arith.addf %10, %13 : vector<8x128xf32>
    %c0_15 = arith.constant 0 : index
    %c0_16 = arith.constant 0 : index
    %15 = vector.load %arg6[%c0_15, %c0_16] : memref<1x128xf32, #tpu.memory_space<vmem>>, vector<1x128xf32>
    %16 = vector.broadcast %15 : vector<1x128xf32> to vector<8x128xf32>
    %17 = arith.addf %14, %16 : vector<8x128xf32>
    %cst_17 = arith.constant 0.000000e+00 : f32
    %18 = vector.broadcast %cst_17 : f32 to vector<8x128xf32>
    %19 = arith.maximumf %17, %18 : vector<8x128xf32>
    %c0_18 = arith.constant 0 : index
    %c0_19 = arith.constant 0 : index
    %20 = vector.load %arg7[%c0_18, %c0_19] : memref<128x128xf32, #tpu.memory_space<vmem>>, vector<128x128xf32>
    %cst_20 = arith.constant dense<0.000000e+00> : vector<8x128xf32>
    %21 = tpu.matmul %19, %20, %cst_20 {dimension_numbers = #tpu.dot_dimension_numbers<[1], [0], [0], [1], [0, 0, 1, 1], [], []>} : vector<8x128xf32>, vector<128x128xf32>, vector<8x128xf32> -> vector<8x128xf32>
    %c0_21 = arith.constant 0 : index
    %c0_22 = arith.constant 0 : index
    %22 = vector.load %arg8[%c0_21, %c0_22] : memref<1x128xf32, #tpu.memory_space<vmem>>, vector<1x128xf32>
    %23 = vector.broadcast %22 : vector<1x128xf32> to vector<8x128xf32>
    %24 = arith.addf %21, %23 : vector<8x128xf32>
    %c0_23 = arith.constant 0 : index
    %c0_24 = arith.constant 0 : index
    %25 = vector.load %arg9[%c0_23, %c0_24] : memref<8x128xf32, #tpu.memory_space<vmem>>, vector<8x128xf32>
    tpu.vector_store %arg9[%c0_23, %c0_24], %24 {strides = array<i32>} : memref<8x128xf32, #tpu.memory_space<vmem>>, vector<8x128xf32>,
    return
  }
  func.func @transform_0(%arg0: i32) -> (i32, i32) {
    %c0_i32 = arith.constant 0 : i32
    %c0_i32_0 = arith.constant 0 : i32
    return %arg0, %c0_i32 : i32, i32
  }
  func.func @transform_1(%arg0: i32) -> (i32, i32) {
    %c0_i32 = arith.constant 0 : i32
    %c0_i32_0 = arith.constant 0 : i32
    return %arg0, %c0_i32 : i32, i32
  }
  func.func @transform_2(%arg0: i32) -> (i32, i32) {
    %c0_i32 = arith.constant 0 : i32
    %c0_i32_0 = arith.constant 0 : i32
    return %arg0, %c0_i32 : i32, i32
  }
  func.func @transform_3(%arg0: i32) -> (i32, i32) {
    %c0_i32 = arith.constant 0 : i32
    %c0_i32_0 = arith.constant 0 : i32
    return %arg0, %c0_i32 : i32, i32
  }
  func.func @transform_4(%arg0: i32) -> (i32, i32) {
    %c0_i32 = arith.constant 0 : i32
    %c0_i32_0 = arith.constant 0 : i32
    %c0_i32_1 = arith.constant 0 : i32
    return %c0_i32, %c0_i32_0 : i32, i32
  }
  func.func @transform_5(%arg0: i32) -> (i32, i32) {
    %c0_i32 = arith.constant 0 : i32
    %c0_i32_0 = arith.constant 0 : i32
    %c0_i32_1 = arith.constant 0 : i32
    return %c0_i32, %c0_i32_0 : i32, i32
  }
  func.func @transform_6(%arg0: i32) -> (i32, i32) {
    %c0_i32 = arith.constant 0 : i32
    %c0_i32_0 = arith.constant 0 : i32
    %c0_i32_1 = arith.constant 0 : i32
    return %c0_i32, %c0_i32_0 : i32, i32
  }
  func.func @transform_7(%arg0: i32) -> (i32, i32) {
    %c0_i32 = arith.constant 0 : i32
    %c0_i32_0 = arith.constant 0 : i32
    %c0_i32_1 = arith.constant 0 : i32
    return %c0_i32, %c0_i32_0 : i32, i32
  }
  func.func @transform_8(%arg0: i32) -> (i32, i32) {
    %c0_i32 = arith.constant 0 : i32
    %c0_i32_0 = arith.constant 0 : i32
    return %arg0, %c0_i32 : i32, i32
  }
}

</mosaic_0001>

<llo_original>
// kernel: tpu_custom_call.1
$region0: #{tpu_custom_call.1}
  #allocation0 [shape = 'u32[]', space=smem, size = 0x4, offset = 0x4, fixed_abs, tag = 'smem constant byte address 0x4 - core index']
  #allocation1 [shape = 'u32[144,128]{1,0:T(1,128)}', space=vmem, size = 0x12000, scoped, tag = 'internal scratch']
  %s0 = inlined_call_operand.hbm [shape: f32[8,32], index: 0, kind: input, shape index: {}]
  %s1 = inlined_call_operand.hbm [shape: f32[8,32], index: 1, kind: input, shape index: {}]
  %s2 = inlined_call_operand.hbm [shape: f32[8,32], index: 2, kind: input, shape index: {}]
  %s3 = inlined_call_operand.vmem [shape: f32[8,32], index: 3, kind: input, shape index: {}]
  %s4 = inlined_call_operand.hbm [shape: f32[128,128], index: 4, kind: input, shape index: {}]
  %s5 = inlined_call_operand.vmem [shape: f32[1,128], index: 5, kind: input, shape index: {}]
  %s6 = inlined_call_operand.hbm [shape: f32[128,128], index: 6, kind: input, shape index: {}]
  %s7 = inlined_call_operand.vmem [shape: f32[1,128], index: 7, kind: input, shape index: {}]
  %s8 = inlined_call_operand.hbm [shape: f32[8,128], index: 8, kind: output, shape index: {}]
  %s9 = sld [smem:[#allocation0]]
  $region62: #{tpu_custom_call.1} parent=0
    _
  %s11 = ssub.s32 1, %s9
  %s12 = scalar_select 0, %s11, %s9
  $region1: #{tpu_custom_call.1} parent=0
    #allocation2 [shape = 'u8[4096]{0}', space=vmem, size = 0x1000, scoped, tag = 'input window, operand 0, single buffered']
    #allocation3 [shape = 's32[1]{0}', space=sflag, size = 0x4, scoped, tag = 'scoped memory for tpu_custom_call.1']
    #allocation4 [shape = 's32[1]{0}', space=sflag, size = 0x4, scoped, tag = 'scoped memory for tpu_custom_call.1']
    #allocation5 [shape = 'u8[4096]{0}', space=vmem, size = 0x1000, scoped, tag = 'input window, operand 1, single buffered']
    #allocation6 [shape = 's32[1]{0}', space=sflag, size = 0x4, scoped, tag = 'scoped memory for tpu_custom_call.1']
    #allocation7 [shape = 'u8[4096]{0}', space=vmem, size = 0x1000, scoped, tag = 'input window, operand 2, single buffered']
    #allocation8 [shape = 'u8[65536]{0}', space=vmem, size = 0x10000, scoped, tag = 'input window, operand 4, single buffered']
    #allocation9 [shape = 's32[1]{0}', space=sflag, size = 0x4, scoped, tag = 'scoped memory for tpu_custom_call.1']
    #allocation10 [shape = 'u8[65536]{0}', space=vmem, size = 0x10000, scoped, tag = 'input window, operand 6, single buffered']
    #allocation11 [shape = 'u8[4096]{0}', space=vmem, size = 0x1000, scoped, tag = 'output window, operand 0, single buffered']
    %13 = vsyncpa [#allocation3], 0
    %14 = vsyncpa [#allocation6], 0
    %15 = vsyncpa [#allocation9], 0
    %16 = vsyncpa [#allocation4], 0
    // Predicated region
    $region2: #{tpu_custom_call.1} parent=1 // pred_check
      _
    $region3: #{tpu_custom_call.1} parent=1 // pred_check_branch
      %18 = sbr.rel (0) target = $region5
    $region4: #{tpu_custom_call.1} parent=1 // pred_region
      %s20 = ssub.s32 128, 128
      %21 = vsyncadd [#allocation3], %s20
      %s23 = sshll.u32 [#allocation2], 4
      %s24 = int_to_ptr.vmem [resolvable:$true] %s23
      %26 = dma.hbm_to_vmem [thread:$0]  %s0, 128, %s24, [#allocation3]
    $region5: #{tpu_custom_call.1} parent=1 // pred_fallthru
      _
    // Predicated region
    $region6: #{tpu_custom_call.1} parent=1 // pred_check
      _
    $region7: #{tpu_custom_call.1} parent=1 // pred_check_branch
      %28 = sbr.rel (0) target = $region9
    $region8: #{tpu_custom_call.1} parent=1 // pred_region
      %s30 = ssub.s32 128, 128
      %31 = vsyncadd [#allocation6], %s30
      %s33 = sshll.u32 [#allocation5], 4
      %s34 = int_to_ptr.vmem [resolvable:$true] %s33
      %36 = dma.hbm_to_vmem [thread:$0]  %s1, 128, %s34, [#allocation6]
    $region9: #{tpu_custom_call.1} parent=1 // pred_fallthru
      _
    // Predicated region
    $region10: #{tpu_custom_call.1} parent=1 // pred_check
      _
    $region11: #{tpu_custom_call.1} parent=1 // pred_check_branch
      %38 = sbr.rel (0) target = $region13
    $region12: #{tpu_custom_call.1} parent=1 // pred_region
      %s40 = ssub.s32 128, 128
      %41 = vsyncadd [#allocation6], %s40
      %s43 = sshll.u32 [#allocation7], 4
      %s44 = int_to_ptr.vmem [resolvable:$true] %s43
      %46 = dma.hbm_to_vmem [thread:$0]  %s2, 128, %s44, [#allocation6]
    $region13: #{tpu_custom_call.1} parent=1 // pred_fallthru
      _
    // Predicated region
    $region14: #{tpu_custom_call.1} parent=1 // pred_check
      _
    $region15: #{tpu_custom_call.1} parent=1 // pred_check_branch
      %48 = sbr.rel (0) target = $region17
    $region16: #{tpu_custom_call.1} parent=1 // pred_region
      _
    $region17: #{tpu_custom_call.1} parent=1 // pred_fallthru
      _
    // Predicated region
    $region18: #{tpu_custom_call.1} parent=1 // pred_check
      _
    $region19: #{tpu_custom_call.1} parent=1 // pred_check_branch
      %50 = sbr.rel (0) target = $region21
    $region20: #{tpu_custom_call.1} parent=1 // pred_region
      %s52 = ssub.s32 2048, 2048
      %53 = vsyncadd [#allocation9], %s52
      %s54 = sshll.u32 [#allocation8], 4
      %s55 = int_to_ptr.vmem [resolvable:$true] %s54
      %60 = dma.hbm_to_vmem [thread:$0]  %s4, 2048, %s55, [#allocation9], 128, 128, 8
    $region21: #{tpu_custom_call.1} parent=1 // pred_fallthru
      _
    // Predicated region
    $region22: #{tpu_custom_call.1} parent=1 // pred_check
      _
    $region23: #{tpu_custom_call.1} parent=1 // pred_check_branch
      %62 = sbr.rel (0) target = $region25
    $region24: #{tpu_custom_call.1} parent=1 // pred_region
      _
    $region25: #{tpu_custom_call.1} parent=1 // pred_fallthru
      _
    // Predicated region
    $region26: #{tpu_custom_call.1} parent=1 // pred_check
      _
    $region27: #{tpu_custom_call.1} parent=1 // pred_check_branch
      %64 = sbr.rel (0) target = $region29
    $region28: #{tpu_custom_call.1} parent=1 // pred_region
      %s66 = ssub.s32 2048, 2048
      %67 = vsyncadd [#allocation9], %s66
      %s68 = sshll.u32 [#allocation10], 4
      %s69 = int_to_ptr.vmem [resolvable:$true] %s68
      %74 = dma.hbm_to_vmem [thread:$0]  %s6, 2048, %s69, [#allocation9], 128, 128, 8
    $region29: #{tpu_custom_call.1} parent=1 // pred_fallthru
      _
    // Predicated region
    $region30: #{tpu_custom_call.1} parent=1 // pred_check
      _
    $region31: #{tpu_custom_call.1} parent=1 // pred_check_branch
      %76 = sbr.rel (0) target = $region33
    $region32: #{tpu_custom_call.1} parent=1 // pred_region
      _
    $region33: #{tpu_custom_call.1} parent=1 // pred_fallthru
      _
    // Predicated region
    $region34: #{tpu_custom_call.1} parent=1 // pred_check
      _
    $region35: #{tpu_custom_call.1} parent=1 // pred_check_branch
      %78 = sbr.rel (0) target = $region37
    $region36: #{tpu_custom_call.1} parent=1 // pred_region
      %79 = dma.done [#allocation3], 128
    $region37: #{tpu_custom_call.1} parent=1 // pred_fallthru
      _
    // Predicated region
    $region38: #{tpu_custom_call.1} parent=1 // pred_check
      _
    $region39: #{tpu_custom_call.1} parent=1 // pred_check_branch
      %81 = sbr.rel (0) target = $region41
    $region40: #{tpu_custom_call.1} parent=1 // pred_region
      %82 = dma.done [#allocation6], 128
    $region41: #{tpu_custom_call.1} parent=1 // pred_fallthru
      _
    // Predicated region
    $region42: #{tpu_custom_call.1} parent=1 // pred_check
      _
    $region43: #{tpu_custom_call.1} parent=1 // pred_check_branch
      %84 = sbr.rel (0) target = $region45
    $region44: #{tpu_custom_call.1} parent=1 // pred_region
      %85 = dma.done [#allocation6], 128
    $region45: #{tpu_custom_call.1} parent=1 // pred_fallthru
      _
    // Predicated region
    $region46: #{tpu_custom_call.1} parent=1 // pred_check
      _
    $region47: #{tpu_custom_call.1} parent=1 // pred_check_branch
      %87 = sbr.rel (0) target = $region49
    $region48: #{tpu_custom_call.1} parent=1 // pred_region
      %88 = dma.done [#allocation9], 2048
    $region49: #{tpu_custom_call.1} parent=1 // pred_fallthru
      _
    // Predicated region
    $region50: #{tpu_custom_call.1} parent=1 // pred_check
      _
    $region51: #{tpu_custom_call.1} parent=1 // pred_check_branch
      %90 = sbr.rel (0) target = $region53
    $region52: #{tpu_custom_call.1} parent=1 // pred_region
      %91 = dma.done [#allocation9], 2048
    $region53: #{tpu_custom_call.1} parent=1 // pred_fallthru
      _
    %v92 = vld [vmem:[#allocation2] sm:$0xff]
    %v93 = vld [vmem:[#allocation8] sm:$0xff]
    %v94 = vld [vmem:[#allocation8 + $0x8] sm:$0xff]
    %v95 = vld [vmem:[#allocation8 + $0x10] sm:$0xff]
    %v96 = vld [vmem:[#allocation8 + $0x18] sm:$0xff]
    %v97 = vld [vmem:[#allocation5] sm:$0xff]
    %v98 = vld [vmem:[#allocation8 + $0x20] sm:$0xff]
    %v99 = vld [vmem:[#allocation8 + $0x28] sm:$0xff]
    %v100 = vld [vmem:[#allocation8 + $0x30] sm:$0xff]
    %v101 = vld [vmem:[#allocation8 + $0x38] sm:$0xff]
    %vm102 = vcmask 261120
    %v104 = vsel %vm102, %v97, 0
    %106 = vmatprep.subr.mxu0 0.0
    %107 = vmatpush1.msra.mxu0 %v98
    %108 = vmatprep.subr.mxu0 0.0
    %109 = vmatpush1.msra.mxu0 %v99
    %110 = vmatprep.subr.mxu0 0.0
    %111 = vmatpush1.msra.mxu0 %v100
    %112 = vmatprep.subr.mxu0 0.0
    %113 = vmatpush1.msra.mxu0 %v101
    %114 = vmatprep.subr.mxu0 0.0
    %115 = vmatpush1.msra.mxu0 0.0
    %116 = vmatprep.subr.mxu0 0.0
    %117 = vmatpush1.msra.mxu0 0.0
    %118 = vmatprep.subr.mxu0 0.0
    %119 = vmatpush1.msra.mxu0 0.0
    %120 = vmatprep.subr.mxu0 0.0
    %121 = vmatpush1.msra.mxu0 0.0
    %122 = vmatprep.subr.mxu0 0.0
    %123 = vmatpush1.msra.mxu0 0.0
    %124 = vmatprep.subr.mxu0 0.0
    %125 = vmatpush1.msra.mxu0 0.0
    %126 = vmatprep.subr.mxu0 0.0
    %127 = vmatpush1.msra.mxu0 0.0
    %128 = vmatprep.subr.mxu0 0.0
    %129 = vmatpush1.msra.mxu0 0.0
    %130 = vmatprep.subr.mxu0 0.0
    %131 = vmatpush1.msra.mxu0 0.0
    %132 = vmatprep.subr.mxu0 0.0
    %133 = vmatpush1.msra.mxu0 0.0
    %134 = vmatprep.subr.mxu0 0.0
    %135 = vmatpush1.msra.mxu0 0.0
    %136 = vmatprep.subr.mxu0 0.0
    %137 = vmatpush1.msra.mxu0 0.0
    %138 = vmatprep.subr.mxu0 0.0
    %139 = vmatpush1.msra.mxu0 0.0
    %140 = vmatprep.subr.mxu0 0.0
    %141 = vmatpush1.msra.mxu0 0.0
    %142 = vmatprep.subr.mxu0 0.0
    %143 = vmatpush1.msra.mxu0 0.0
    %144 = vmatprep.subr.mxu0 0.0
    %145 = vmatpush1.msra.mxu0 0.0
    %146 = vmatprep.subr.mxu0 0.0
    %147 = vmatpush1.msra.mxu0 0.0
    %148 = vmatprep.subr.mxu0 0.0
    %149 = vmatpush1.msra.mxu0 0.0
    %150 = vmatprep.subr.mxu0 0.0
    %151 = vmatpush1.msra.mxu0 0.0
    %152 = vmatprep.subr.mxu0 0.0
    %153 = vmatpush1.msra.mxu0 0.0
    %154 = vmatprep.subr.mxu0 0.0
    %155 = vmatpush1.msra.mxu0 0.0
    %156 = vmatprep.subr.mxu0 0.0
    %157 = vmatpush1.msra.mxu0 0.0
    %158 = vmatprep.subr.mxu0 0.0
    %159 = vmatpush1.msra.mxu0 0.0
    %160 = vmatprep.subr.mxu0 0.0
    %161 = vmatpush1.msra.mxu0 0.0
    %162 = vmatprep.subr.mxu0 0.0
    %163 = vmatpush1.msra.mxu0 0.0
    %164 = vmatprep.subr.mxu0 0.0
    %165 = vmatpush1.msra.mxu0 0.0
    %166 = vmatprep.subr.mxu0 0.0
    %167 = vmatpush1.msra.mxu0 0.0
    %168 = vmatprep.subr.mxu0 0.0
    %169 = vmatpush1.msra.mxu0 0.0
    %170 = vmatprep.mubr.f32.mxu0 0.0
    %171 = vmatmul.mubr.f32.gmra.mrb[0].mxu0 %v104
    %v172 = vpop.f32.mrb[0].mxu0
    %v173 = vadd.f32 0.0, %v172
    %v174 = vpop.f32.mrb[0].mxu0
    %175 = vdwg.mxu0
    %v177 = vsel %vm102, %v92, 0
    %179 = vmatprep.subr.mxu0 0.0
    %180 = vmatpush1.msra.mxu0 %v93
    %181 = vmatprep.subr.mxu0 0.0
    %182 = vmatpush1.msra.mxu0 %v94
    %183 = vmatprep.subr.mxu0 0.0
    %184 = vmatpush1.msra.mxu0 %v95
    %185 = vmatprep.subr.mxu0 0.0
    %186 = vmatpush1.msra.mxu0 %v96
    %187 = vmatprep.subr.mxu0 0.0
    %188 = vmatpush1.msra.mxu0 0.0
    %189 = vmatprep.subr.mxu0 0.0
    %190 = vmatpush1.msra.mxu0 0.0
    %191 = vmatprep.subr.mxu0 0.0
    %192 = vmatpush1.msra.mxu0 0.0
    %193 = vmatprep.subr.mxu0 0.0
    %194 = vmatpush1.msra.mxu0 0.0
    %195 = vmatprep.subr.mxu0 0.0
    %196 = vmatpush1.msra.mxu0 0.0
    %197 = vmatprep.subr.mxu0 0.0
    %198 = vmatpush1.msra.mxu0 0.0
    %199 = vmatprep.subr.mxu0 0.0
    %200 = vmatpush1.msra.mxu0 0.0
    %201 = vmatprep.subr.mxu0 0.0
    %202 = vmatpush1.msra.mxu0 0.0
    %203 = vmatprep.subr.mxu0 0.0
    %204 = vmatpush1.msra.mxu0 0.0
    %205 = vmatprep.subr.mxu0 0.0
    %206 = vmatpush1.msra.mxu0 0.0
    %207 = vmatprep.subr.mxu0 0.0
    %208 = vmatpush1.msra.mxu0 0.0
    %209 = vmatprep.subr.mxu0 0.0
    %210 = vmatpush1.msra.mxu0 0.0
    %211 = vmatprep.subr.mxu0 0.0
    %212 = vmatpush1.msra.mxu0 0.0
    %213 = vmatprep.subr.mxu0 0.0
    %214 = vmatpush1.msra.mxu0 0.0
    %215 = vmatprep.subr.mxu0 0.0
    %216 = vmatpush1.msra.mxu0 0.0
    %217 = vmatprep.subr.mxu0 0.0
    %218 = vmatpush1.msra.mxu0 0.0
    %219 = vmatprep.subr.mxu0 0.0
    %220 = vmatpush1.msra.mxu0 0.0
    %221 = vmatprep.subr.mxu0 0.0
    %222 = vmatpush1.msra.mxu0 0.0
    %223 = vmatprep.subr.mxu0 0.0
    %224 = vmatpush1.msra.mxu0 0.0
    %225 = vmatprep.subr.mxu0 0.0
    %226 = vmatpush1.msra.mxu0 0.0
    %227 = vmatprep.subr.mxu0 0.0
    %228 = vmatpush1.msra.mxu0 0.0
    %229 = vmatprep.subr.mxu0 0.0
    %230 = vmatpush1.msra.mxu0 0.0
    %231 = vmatprep.subr.mxu0 0.0
    %232 = vmatpush1.msra.mxu0 0.0
    %233 = vmatprep.subr.mxu0 0.0
    %234 = vmatpush1.msra.mxu0 0.0
    %235 = vmatprep.subr.mxu0 0.0
    %236 = vmatpush1.msra.mxu0 0.0
    %237 = vmatprep.subr.mxu0 0.0
    %238 = vmatpush1.msra.mxu0 0.0
    %239 = vmatprep.subr.mxu0 0.0
    %240 = vmatpush1.msra.mxu0 0.0
    %241 = vmatprep.subr.mxu0 0.0
    %242 = vmatpush1.msra.mxu0 0.0
    %243 = vmatprep.mubr.f32.mxu0 0.0
    %244 = vmatmul.mubr.f32.gmra.mrb[0].mxu0 %v177
    %v245 = vpop.f32.mrb[0].mxu0
    %v246 = vadd.f32 %v173, %v245
    %v247 = vpop.f32.mrb[0].mxu0
    %248 = vdwg.mxu0
    %v249 = vld [vmem:[#allocation7] sm:$0xff]
    %v250 = vld [vmem:[#allocation8 + $0x40] sm:$0xff]
    %v251 = vld [vmem:[#allocation8 + $0x48] sm:$0xff]
    %v252 = vld [vmem:[#allocation8 + $0x50] sm:$0xff]
    %v253 = vld [vmem:[#allocation8 + $0x58] sm:$0xff]
    %v255 = vsel %vm102, %v249, 0
    %257 = vmatprep.subr.mxu0 0.0
    %258 = vmatpush1.msra.mxu0 %v250
    %259 = vmatprep.subr.mxu0 0.0
    %260 = vmatpush1.msra.mxu0 %v251
    %261 = vmatprep.subr.mxu0 0.0
    %262 = vmatpush1.msra.mxu0 %v252
    %263 = vmatprep.subr.mxu0 0.0
    %264 = vmatpush1.msra.mxu0 %v253
    %265 = vmatprep.subr.mxu0 0.0
    %266 = vmatpush1.msra.mxu0 0.0
    %267 = vmatprep.subr.mxu0 0.0
    %268 = vmatpush1.msra.mxu0 0.0
    %269 = vmatprep.subr.mxu0 0.0
    %270 = vmatpush1.msra.mxu0 0.0
    %271 = vmatprep.subr.mxu0 0.0
    %272 = vmatpush1.msra.mxu0 0.0
    %273 = vmatprep.subr.mxu0 0.0
    %274 = vmatpush1.msra.mxu0 0.0
    %275 = vmatprep.subr.mxu0 0.0
    %276 = vmatpush1.msra.mxu0 0.0
    %277 = vmatprep.subr.mxu0 0.0
    %278 = vmatpush1.msra.mxu0 0.0
    %279 = vmatprep.subr.mxu0 0.0
    %280 = vmatpush1.msra.mxu0 0.0
    %281 = vmatprep.subr.mxu0 0.0
    %282 = vmatpush1.msra.mxu0 0.0
    %283 = vmatprep.subr.mxu0 0.0
    %284 = vmatpush1.msra.mxu0 0.0
    %285 = vmatprep.subr.mxu0 0.0
    %286 = vmatpush1.msra.mxu0 0.0
    %287 = vmatprep.subr.mxu0 0.0
    %288 = vmatpush1.msra.mxu0 0.0
    %289 = vmatprep.subr.mxu0 0.0
    %290 = vmatpush1.msra.mxu0 0.0
    %291 = vmatprep.subr.mxu0 0.0
    %292 = vmatpush1.msra.mxu0 0.0
    %293 = vmatprep.subr.mxu0 0.0
    %294 = vmatpush1.msra.mxu0 0.0
    %295 = vmatprep.subr.mxu0 0.0
    %296 = vmatpush1.msra.mxu0 0.0
    %297 = vmatprep.subr.mxu0 0.0
    %298 = vmatpush1.msra.mxu0 0.0
    %299 = vmatprep.subr.mxu0 0.0
    %300 = vmatpush1.msra.mxu0 0.0
    %301 = vmatprep.subr.mxu0 0.0
    %302 = vmatpush1.msra.mxu0 0.0
    %303 = vmatprep.subr.mxu0 0.0
    %304 = vmatpush1.msra.mxu0 0.0
    %305 = vmatprep.subr.mxu0 0.0
    %306 = vmatpush1.msra.mxu0 0.0
    %307 = vmatprep.subr.mxu0 0.0
    %308 = vmatpush1.msra.mxu0 0.0
    %309 = vmatprep.subr.mxu0 0.0
    %310 = vmatpush1.msra.mxu0 0.0
    %311 = vmatprep.subr.mxu0 0.0
    %312 = vmatpush1.msra.mxu0 0.0
    %313 = vmatprep.subr.mxu0 0.0
    %314 = vmatpush1.msra.mxu0 0.0
    %315 = vmatprep.subr.mxu0 0.0
    %316 = vmatpush1.msra.mxu0 0.0
    %317 = vmatprep.subr.mxu0 0.0
    %318 = vmatpush1.msra.mxu0 0.0
    %319 = vmatprep.subr.mxu0 0.0
    %320 = vmatpush1.msra.mxu0 0.0
    %321 = vmatprep.mubr.f32.mxu0 0.0
    %322 = vmatmul.mubr.f32.gmra.mrb[0].mxu0 %v255
    %v323 = vpop.f32.mrb[0].mxu0
    %v324 = vadd.f32 0.0, %v323
    %v325 = vpop.f32.mrb[0].mxu0
    %326 = vdwg.mxu0
    %v327 = vadd.f32 %v246, %v324
    %v328 = vld [vmem:[%s3] sm:$0xff]
    %v329 = vld [vmem:[#allocation8 + $0x60] sm:$0xff]
    %v330 = vld [vmem:[#allocation8 + $0x68] sm:$0xff]
    %v331 = vld [vmem:[#allocation8 + $0x70] sm:$0xff]
    %v332 = vld [vmem:[#allocation8 + $0x78] sm:$0xff]
    %v334 = vsel %vm102, %v328, 0
    %336 = vmatprep.subr.mxu0 0.0
    %337 = vmatpush1.msra.mxu0 %v329
    %338 = vmatprep.subr.mxu0 0.0
    %339 = vmatpush1.msra.mxu0 %v330
    %340 = vmatprep.subr.mxu0 0.0
    %341 = vmatpush1.msra.mxu0 %v331
    %342 = vmatprep.subr.mxu0 0.0
    %343 = vmatpush1.msra.mxu0 %v332
    %344 = vmatprep.subr.mxu0 0.0
    %345 = vmatpush1.msra.mxu0 0.0
    %346 = vmatprep.subr.mxu0 0.0
    %347 = vmatpush1.msra.mxu0 0.0
    %348 = vmatprep.subr.mxu0 0.0
    %349 = vmatpush1.msra.mxu0 0.0
    %350 = vmatprep.subr.mxu0 0.0
    %351 = vmatpush1.msra.mxu0 0.0
    %352 = vmatprep.subr.mxu0 0.0
    %353 = vmatpush1.msra.mxu0 0.0
    %354 = vmatprep.subr.mxu0 0.0
    %355 = vmatpush1.msra.mxu0 0.0
    %356 = vmatprep.subr.mxu0 0.0
    %357 = vmatpush1.msra.mxu0 0.0
    %358 = vmatprep.subr.mxu0 0.0
    %359 = vmatpush1.msra.mxu0 0.0
    %360 = vmatprep.subr.mxu0 0.0
    %361 = vmatpush1.msra.mxu0 0.0
    %362 = vmatprep.subr.mxu0 0.0
    %363 = vmatpush1.msra.mxu0 0.0
    %364 = vmatprep.subr.mxu0 0.0
    %365 = vmatpush1.msra.mxu0 0.0
    %366 = vmatprep.subr.mxu0 0.0
    %367 = vmatpush1.msra.mxu0 0.0
    %368 = vmatprep.subr.mxu0 0.0
    %369 = vmatpush1.msra.mxu0 0.0
    %370 = vmatprep.subr.mxu0 0.0
    %371 = vmatpush1.msra.mxu0 0.0
    %372 = vmatprep.subr.mxu0 0.0
    %373 = vmatpush1.msra.mxu0 0.0
    %374 = vmatprep.subr.mxu0 0.0
    %375 = vmatpush1.msra.mxu0 0.0
    %376 = vmatprep.subr.mxu0 0.0
    %377 = vmatpush1.msra.mxu0 0.0
    %378 = vmatprep.subr.mxu0 0.0
    %379 = vmatpush1.msra.mxu0 0.0
    %380 = vmatprep.subr.mxu0 0.0
    %381 = vmatpush1.msra.mxu0 0.0
    %382 = vmatprep.subr.mxu0 0.0
    %383 = vmatpush1.msra.mxu0 0.0
    %384 = vmatprep.subr.mxu0 0.0
    %385 = vmatpush1.msra.mxu0 0.0
    %386 = vmatprep.subr.mxu0 0.0
    %387 = vmatpush1.msra.mxu0 0.0
    %388 = vmatprep.subr.mxu0 0.0
    %389 = vmatpush1.msra.mxu0 0.0
    %390 = vmatprep.subr.mxu0 0.0
    %391 = vmatpush1.msra.mxu0 0.0
    %392 = vmatprep.subr.mxu0 0.0
    %393 = vmatpush1.msra.mxu0 0.0
    %394 = vmatprep.subr.mxu0 0.0
    %395 = vmatpush1.msra.mxu0 0.0
    %396 = vmatprep.subr.mxu0 0.0
    %397 = vmatpush1.msra.mxu0 0.0
    %398 = vmatprep.subr.mxu0 0.0
    %399 = vmatpush1.msra.mxu0 0.0
    %400 = vmatprep.mubr.f32.mxu0 0.0
    %401 = vmatmul.mubr.f32.gmra.mrb[0].mxu0 %v334
    %v402 = vpop.f32.mrb[0].mxu0
    %v403 = vadd.f32 0.0, %v402
    %v404 = vpop.f32.mrb[0].mxu0
    %405 = vdwg.mxu0
    %v406 = vadd.f32 %v327, %v403
    %v407 = vld [vmem:[%s5] sm:$0x1]
    %v409 = vlaneseq
    %v410 = vshrl.u32 %v409, 7
    %v411 = vsub.s32 0, %v410
    %v412 = vrot.slane %v407, %v411
    %v414 = vadd.f32 %v406, %v412
    %v415 = vmax.f32 %v414, 0.0
    %v416 = vld [vmem:[#allocation10] sm:$0xff]
    %v417 = vld [vmem:[#allocation10 + $0x8] sm:$0xff]
    %v418 = vld [vmem:[#allocation10 + $0x10] sm:$0xff]
    %v419 = vld [vmem:[#allocation10 + $0x18] sm:$0xff]
    %v420 = vld [vmem:[#allocation10 + $0x20] sm:$0xff]
    %v421 = vld [vmem:[#allocation10 + $0x28] sm:$0xff]
    %v422 = vld [vmem:[#allocation10 + $0x30] sm:$0xff]
    %v423 = vld [vmem:[#allocation10 + $0x38] sm:$0xff]
    %v424 = vld [vmem:[#allocation10 + $0x40] sm:$0xff]
    %v425 = vld [vmem:[#allocation10 + $0x48] sm:$0xff]
    %v426 = vld [vmem:[#allocation10 + $0x50] sm:$0xff]
    %v427 = vld [vmem:[#allocation10 + $0x58] sm:$0xff]
    %v428 = vld [vmem:[#allocation10 + $0x60] sm:$0xff]
    %v429 = vld [vmem:[#allocation10 + $0x68] sm:$0xff]
    %v430 = vld [vmem:[#allocation10 + $0x70] sm:$0xff]
    %v431 = vld [vmem:[#allocation10 + $0x78] sm:$0xff]
    %v432 = vld [vmem:[%s7] sm:$0x1]
    %v434 = vlaneseq
    %v435 = vshrl.u32 %v434, 7
    %v436 = vsub.s32 0, %v435
    %v437 = vrot.slane %v432, %v436
    %439 = vmatprep.subr.mxu0 0.0
    %440 = vmatpush1.msra.mxu0 %v416
    %441 = vmatprep.subr.mxu0 0.0
    %442 = vmatpush1.msra.mxu0 %v417
    %443 = vmatprep.subr.mxu0 0.0
    %444 = vmatpush1.msra.mxu0 %v418
    %445 = vmatprep.subr.mxu0 0.0
    %446 = vmatpush1.msra.mxu0 %v419
    %447 = vmatprep.subr.mxu0 0.0
    %448 = vmatpush1.msra.mxu0 %v420
    %449 = vmatprep.subr.mxu0 0.0
    %450 = vmatpush1.msra.mxu0 %v421
    %451 = vmatprep.subr.mxu0 0.0
    %452 = vmatpush1.msra.mxu0 %v422
    %453 = vmatprep.subr.mxu0 0.0
    %454 = vmatpush1.msra.mxu0 %v423
    %455 = vmatprep.subr.mxu0 0.0
    %456 = vmatpush1.msra.mxu0 %v424
    %457 = vmatprep.subr.mxu0 0.0
    %458 = vmatpush1.msra.mxu0 %v425
    %459 = vmatprep.subr.mxu0 0.0
    %460 = vmatpush1.msra.mxu0 %v426
    %461 = vmatprep.subr.mxu0 0.0
    %462 = vmatpush1.msra.mxu0 %v427
    %463 = vmatprep.subr.mxu0 0.0
    %464 = vmatpush1.msra.mxu0 %v428
    %465 = vmatprep.subr.mxu0 0.0
    %466 = vmatpush1.msra.mxu0 %v429
    %467 = vmatprep.subr.mxu0 0.0
    %468 = vmatpush1.msra.mxu0 %v430
    %469 = vmatprep.subr.mxu0 0.0
    %470 = vmatpush1.msra.mxu0 %v431
    %471 = vmatprep.subr.mxu0 0.0
    %472 = vmatpush1.msra.mxu0 0.0
    %473 = vmatprep.subr.mxu0 0.0
    %474 = vmatpush1.msra.mxu0 0.0
    %475 = vmatprep.subr.mxu0 0.0
    %476 = vmatpush1.msra.mxu0 0.0
    %477 = vmatprep.subr.mxu0 0.0
    %478 = vmatpush1.msra.mxu0 0.0
    %479 = vmatprep.subr.mxu0 0.0
    %480 = vmatpush1.msra.mxu0 0.0
    %481 = vmatprep.subr.mxu0 0.0
    %482 = vmatpush1.msra.mxu0 0.0
    %483 = vmatprep.subr.mxu0 0.0
    %484 = vmatpush1.msra.mxu0 0.0
    %485 = vmatprep.subr.mxu0 0.0
    %486 = vmatpush1.msra.mxu0 0.0
    %487 = vmatprep.subr.mxu0 0.0
    %488 = vmatpush1.msra.mxu0 0.0
    %489 = vmatprep.subr.mxu0 0.0
    %490 = vmatpush1.msra.mxu0 0.0
    %491 = vmatprep.subr.mxu0 0.0
    %492 = vmatpush1.msra.mxu0 0.0
    %493 = vmatprep.subr.mxu0 0.0
    %494 = vmatpush1.msra.mxu0 0.0
    %495 = vmatprep.subr.mxu0 0.0
    %496 = vmatpush1.msra.mxu0 0.0
    %497 = vmatprep.subr.mxu0 0.0
    %498 = vmatpush1.msra.mxu0 0.0
    %499 = vmatprep.subr.mxu0 0.0
    %500 = vmatpush1.msra.mxu0 0.0
    %501 = vmatprep.subr.mxu0 0.0
    %502 = vmatpush1.msra.mxu0 0.0
    %503 = vmatprep.mubr.f32.mxu0 0.0
    %504 = vmatmul.mubr.f32.gmra.mrb[0].mxu0 %v415
    %v505 = vpop.f32.mrb[0].mxu0
    %v506 = vadd.f32 %v437, %v505
    %v507 = vpop.f32.mrb[0].mxu0
    %508 = vdwg.mxu0
    %509 = vst [vmem:[#allocation11] sm:$0xff] %v506
    // Predicated region
    $region54: #{tpu_custom_call.1} parent=1 // pred_check
      _
    $region55: #{tpu_custom_call.1} parent=1 // pred_check_branch
      %511 = sbr.rel (0) target = $region57
    $region56: #{tpu_custom_call.1} parent=1 // pred_region
      %s513 = ssub.s32 128, 128
      %514 = vsyncadd [#allocation4], %s513
      %s516 = sshll.u32 [#allocation11], 4
      %s517 = int_to_ptr.vmem [resolvable:$true] %s516
      %519 = dma.vmem_to_hbm [thread:$0]  %s517, 128, %s8, [#allocation4]
    $region57: #{tpu_custom_call.1} parent=1 // pred_fallthru
      _
    // Predicated region
    $region58: #{tpu_custom_call.1} parent=1 // pred_check
      _
    $region59: #{tpu_custom_call.1} parent=1 // pred_check_branch
      %521 = sbr.rel (0) target = $region61
    $region60: #{tpu_custom_call.1} parent=1 // pred_region
      %522 = dma.done [#allocation4], 128
    $region61: #{tpu_custom_call.1} parent=1 // pred_fallthru
      _
    %523 = vsyncpa [#allocation3], 1
    %524 = vsyncpa [#allocation6], 1
    %525 = vsyncpa [#allocation9], 1
    %526 = vsyncpa [#allocation4], 1

</llo_original>
